<compile_context>
chip_gen: v7x
topology: tpu7x:2x2x1
jax: 0.10.0
libtpu: 0.0.40
codegen_flags: <defaults>
</compile_context>

<pallas_src>
import functools
import math

import jax
import jax.numpy as jnp
import numpy as np
from jax.experimental import pallas as pl
from jax.experimental.pallas import tpu as pltpu


# --------------------------------------------------------------------------- #
# Small helpers (plain JAX, f32)
# --------------------------------------------------------------------------- #
def _renorm_rows(a, maxnorm=1e-5, scale=1e5):
    """torch.Tensor.renorm(p=2, dim=0, maxnorm).mul(scale) per row, via rsqrt.

    For row norm n > maxnorm the combined factor is (maxnorm / n) * scale
    == 1 / n (since maxnorm * scale == 1); otherwise it is `scale`.
    """
    n2 = jnp.sum(a * a, axis=1, keepdims=True)
    f = jnp.where(n2 > maxnorm * maxnorm,
                  jax.lax.rsqrt(n2) * (maxnorm * scale), scale)
    return a * f


def _pick_class_tile(requested, num_classes, batch, in_features, mxu_itemsize,
                     vmem_budget_bytes=8 * 1024 * 1024):
    """Pick a lane-aligned class tile.

    Double-buffered tiles must fit a conservative VMEM budget (v7x: 64 MiB
    physical / 32 MiB scoped default).  If the resulting tile count is odd the
    tile is grown (never shrunk) to the next even-count size within the budget
    so the 2-way megacore split can engage on v7x without increasing the grid
    step count on single-TC chips.
    """
    c_padded = pl.cdiv(num_classes, 128) * 128
    tile = max(128, (int(requested) // 128) * 128)
    tile = min(tile, c_padded)

    def footprint(t):
        return (2 * t * in_features * mxu_itemsize      # double-buffered weight tile
                + 2 * batch * t * 4                     # double-buffered f32 out tile
                + batch * in_features * mxu_itemsize    # resident x tile
                + 8 * batch * 4)                        # small per-row vectors

    while tile > 128 and footprint(tile) > vmem_budget_bytes:
        tile -= 128

    nt = pl.cdiv(num_classes, tile)
    if nt > 1 and nt % 2 == 1:
        t2 = tile + 128
        while t2 <= c_padded and footprint(t2) <= vmem_budget_bytes:
            if pl.cdiv(num_classes, t2) % 2 == 0:
                tile = t2
                break
            t2 += 128
    return tile


# --------------------------------------------------------------------------- #
# Kernel: cos_theta tile + hard-mask reductions + fused *s store
# --------------------------------------------------------------------------- #
def _haaml_main_kernel(x_ref, w_ref, cm_ref, lab_ref,      # inputs
                       out_ref, num_ref, lvl_ref,          # outputs
                       num_acc, lvl_acc,                   # VMEM scratch
                       *, s, tiles_per_core, num_classes):
    k = pl.program_id(1)                                # class-tile step on this core
    tile_idx = pl.program_id(0) * tiles_per_core + k    # global class-tile index
    tc = out_ref.shape[1]

    @pl.when(k == 0)
    def _():
        num_acc[...] = jnp.zeros_like(num_acc)
        lvl_acc[...] = jnp.zeros_like(lvl_acc)

    # ---- per-class renorm factor, applied post-matmul -----------------------
    # renorm(2, 0, 1e-5).mul(1e5): scale class c by 1/||w_c|| when
    # ||w_c|| > 1e-5, else by 1e5.  Squared row norms are reduced on the MXU so
    # they arrive directly in lane-major [1, tc] form (avoids a sublane->lane
    # relayout of a [tc, 1] XLU reduction); only row 0 of the 8-row dot is used.
    w2 = w_ref[...].astype(jnp.float32)
    w2 = w2 * w2
    n2 = jax.lax.dot_general(
        jnp.ones((8, w2.shape[1]), jnp.float32), w2,
        dimension_numbers=(((1,), (1,)), ((), ())),
        preferred_element_type=jnp.float32)[0:1, :]               # [1, tc]
    f_row = jnp.where(n2 > 1e-10, jax.lax.rsqrt(n2), 1e5)         # EUP rsqrt

    # ---- cos_theta tile on the MXU (bf16 operands, f32 accumulation) --------
    ct = jax.lax.dot_general(
        x_ref[...], w_ref[...],
        dimension_numbers=(((1,), (1,)), ((), ())),
        preferred_element_type=jnp.float32)                       # [B, tc]
    ct = jnp.clip(ct * f_row, -1.0, 1.0)

    # ---- hard-example mask and per-row reductions ----------------------------
    cm = cm_ref[...]                                              # [B, 1] f32
    lab = lab_ref[...]                                            # [B, 1] int32
    col = jax.lax.broadcasted_iota(jnp.int32, ct.shape, 1) + tile_idx * tc
    mask = (ct > cm) & (col != lab) & (col < num_classes)

    num_acc[...] += jnp.sum(mask.astype(jnp.float32), axis=1, keepdims=True)
    lvl_acc[...] += jnp.sum(jnp.where(mask, ct - cm, 0.0), axis=1, keepdims=True)

    # Fused scale-by-s store (no second [B, C] streaming kernel).
    out_ref[...] = ct * s

    @pl.when(k == pl.num_programs(1) - 1)
    def _():
        num_ref[...] = num_acc[...]
        lvl_ref[...] = lvl_acc[...]


# --------------------------------------------------------------------------- #
# Forward wrapper
# --------------------------------------------------------------------------- #
def haaml_forward(x, label, weight, *, s=64.0, m_0=0.5, t=1.2, loss_weight=10.0,
                  class_tile=512, mxu_dtype=jnp.bfloat16):
    B, D = x.shape
    C = weight.shape[0]

    x = x.astype(jnp.float32)
    weight = weight.astype(jnp.float32)
    label = label.astype(jnp.int32)
    lab2 = label.reshape(B, 1)

    # ---- glue (f32): row-normalize x; gather + renorm label rows -> exact gt.
    # renorm is per-row independent, so gather-then-renorm == renorm-then-gather,
    # and gt / cos_theta_m stay full f32 regardless of the bf16 MXU path.
    x_norm = _renorm_rows(x)
    w_gt = _renorm_rows(weight[label])
    gt = jnp.clip(jnp.sum(x_norm * w_gt, axis=1, keepdims=True), -1.0, 1.0)
    sin_theta = jnp.sqrt(1.0 - gt * gt)
    cos_theta_m = gt * math.cos(m_0) - sin_theta * math.sin(m_0)

    # ---- tiling --------------------------------------------------------------
    mxu_itemsize = jnp.dtype(mxu_dtype).itemsize
    class_tile = _pick_class_tile(class_tile, C, B, D, mxu_itemsize)
    num_tiles = pl.cdiv(C, class_tile)
    # Split the class axis over a leading "parallel" axis so v7x's two
    # TensorCores each reduce half the class tiles (no-op on v5e/v6e).
    core_split = 2 if (num_tiles % 2 == 0 and num_tiles > 1) else 1
    tiles_per_core = num_tiles // core_split

    # bf16 MXU operands (f32 accumulation); in training, keep a persistent bf16
    # replica of the classifier weight to avoid re-casting every step.
    x_mxu = x_norm.astype(mxu_dtype)
    w_mxu = weight.astype(mxu_dtype)

    kernel = functools.partial(_haaml_main_kernel, s=float(s),
                               tiles_per_core=tiles_per_core, num_classes=C)

    ct_s, hard_num_p, hard_lvl_p = pl.pallas_call(
        kernel,
        out_shape=(jax.ShapeDtypeStruct((B, C), jnp.float32),
                   jax.ShapeDtypeStruct((core_split, B, 1), jnp.float32),
                   jax.ShapeDtypeStruct((core_split, B, 1), jnp.float32)),
        grid_spec=pltpu.PrefetchScalarGridSpec(
            num_scalar_prefetch=0,
            grid=(core_split, tiles_per_core),
            in_specs=[
                pl.BlockSpec((B, D), lambda p, k: (0, 0)),
                pl.BlockSpec((class_tile, D),
                             lambda p, k: (p * tiles_per_core + k, 0)),
                pl.BlockSpec((B, 1), lambda p, k: (0, 0)),
                pl.BlockSpec((B, 1), lambda p, k: (0, 0)),
            ],
            out_specs=[
                pl.BlockSpec((B, class_tile),
                             lambda p, k: (0, p * tiles_per_core + k)),
                pl.BlockSpec((None, B, 1), lambda p, k: (p, 0, 0)),
                pl.BlockSpec((None, B, 1), lambda p, k: (p, 0, 0)),
            ],
            scratch_shapes=[pltpu.VMEM((B, 1), jnp.float32),
                            pltpu.VMEM((B, 1), jnp.float32)]),
        compiler_params=pltpu.CompilerParams(
            dimension_semantics=("parallel", "arbitrary")),
    )(x_mxu, w_mxu, cos_theta_m, lab2)

    # ---- glue: per-batch scalar math (matches the torch.no_grad() block) ----
    hard_num = jnp.sum(hard_num_p, axis=0)          # [B, 1]
    hard_lvl = jnp.sum(hard_lvl_p, axis=0)          # [B, 1]
    hard_cos_num = jnp.clip(hard_num, 1.0, float(C))
    H = hard_lvl / hard_cos_num

    new_m = m_0 + t * jnp.log(H + 1.0)
    new_m = jnp.where(new_m > 0.75, jnp.zeros_like(new_m), new_m)
    cos_theta_newm = gt * jnp.cos(new_m) - sin_theta * jnp.sin(new_m)
    threshold = jnp.cos(math.pi - new_m)
    mm = jnp.sin(math.pi - new_m) * new_m
    new_gt = jnp.where(gt > threshold, cos_theta_newm, gt - mm)

    # Patch the single label column per row into the already-scaled kernel
    # output (under jit XLA does this update in place since ct_s has no other
    # consumers -> only B elements touched, no extra [B, C] pass).
    output = ct_s.at[jnp.arange(B), label].set((new_gt * s)[:, 0])

    hard_regularizer = loss_weight * jnp.mean(H)
    return (output, hard_regularizer, gt,
            new_m.reshape(1, -1), H.reshape(1, -1))


# --------------------------------------------------------------------------- #
# Pure-JAX f32 reference (direct transcription of the PyTorch module)
# --------------------------------------------------------------------------- #
def _haaml_reference(x, label, weight, *, s=64.0, m_0=0.5, t=1.2, loss_weight=10.0):
    B = x.shape[0]
    C = weight.shape[0]
    x_norm = _renorm_rows(x.astype(jnp.float32))
    n_weight = _renorm_rows(weight.astype(jnp.float32))
    cos_theta = jnp.clip(
        jnp.dot(x_norm, n_weight.T, precision=jax.lax.Precision.HIGHEST),
        -1.0, 1.0)
    gt = cos_theta[jnp.arange(B), label].reshape(-1, 1)
    sin_theta = jnp.sqrt(1.0 - gt * gt)
    cos_theta_m = gt * math.cos(m_0) - sin_theta * math.sin(m_0)
    hard_mask = (cos_theta > cos_theta_m).astype(jnp.float32)
    hard_mask = hard_mask.at[jnp.arange(B), label].set(0.0)
    hard_cos = jnp.where(hard_mask > 0, cos_theta - cos_theta_m, 0.0)
    hard_num = jnp.clip(jnp.sum(hard_mask, axis=1, keepdims=True), 1.0, float(C))
    hard_lvl = jnp.sum(hard_cos, axis=1, keepdims=True)
    H = hard_lvl / hard_num
    new_m = m_0 + t * jnp.log(H + 1.0)
    new_m = jnp.where(new_m > 0.75, jnp.zeros_like(new_m), new_m)
    cos_theta_newm = gt * jnp.cos(new_m) - sin_theta * jnp.sin(new_m)
    threshold = jnp.cos(math.pi - new_m)
    mm = jnp.sin(math.pi - new_m) * new_m
    new_gt = jnp.where(gt > threshold, cos_theta_newm, gt - mm)
    cos_theta = cos_theta.at[jnp.arange(B), label].set(new_gt[:, 0])
    output = cos_theta * s
    return (output, loss_weight * jnp.mean(H), gt,
            new_m.reshape(1, -1), H.reshape(1, -1))


if __name__ == "__main__":
    # Small shapes consistent with the module defaults (in_feature=128).
    B, D, C = 8, 128, 1024
    key = jax.random.PRNGKey(0)
    kx, kw, kl = jax.random.split(key, 3)

    x = jax.random.normal(kx, (B, D), dtype=jnp.float32)
    # Deterministic xavier_uniform_-style init for weight [out_feature, in_feature].
    bound = math.sqrt(6.0 / (C + D))
    weight = jax.random.uniform(kw, (C, D), minval=-bound, maxval=bound,
                                dtype=jnp.float32)
    label = jax.random.randint(kl, (B,), 0, C, dtype=jnp.int32)

    # class_tile=256 here so the test exercises both grid axes (2 cores x 2 tiles).
    fwd = jax.jit(functools.partial(haaml_forward, class_tile=256))
    outs = jax.block_until_ready(fwd(x, label, weight))
    output, hard_reg, gt, new_m, H = outs

    assert output.shape == (B, C)
    assert gt.shape == (B, 1)
    assert new_m.shape == (1, B)
    assert H.shape == (1, B)
    assert hard_reg.shape == ()

    # Numerical check against the pure-JAX f32 reference (loose tolerances on
    # the [B, C] logits because the kernel uses bf16 MXU operands).
    ref_out, ref_reg, ref_gt, ref_new_m, ref_H = _haaml_reference(x, label, weight)
    np.testing.assert_allclose(np.asarray(gt), np.asarray(ref_gt),
                               atol=1e-4, rtol=1e-3)
    np.testing.assert_allclose(np.asarray(H), np.asarray(ref_H),
                               atol=5e-3, rtol=2e-2)
    np.testing.assert_allclose(np.asarray(new_m), np.asarray(ref_new_m),
                               atol=5e-3, rtol=2e-2)
    np.testing.assert_allclose(np.asarray(output), np.asarray(ref_out),
                               atol=1.0, rtol=2e-2)
    np.testing.assert_allclose(float(hard_reg), float(ref_reg),
                               atol=5e-2, rtol=2e-2)

    print("KERNEL_OK")
</pallas_src>

<mosaic_0001>
module attributes {stable_mosaic.version = 11 : i64} {
  func.func @_haaml_main_kernel(%arg0: i32, %arg1: i32, %arg2: memref<8x128xbf16, #tpu.memory_space<vmem>>, %arg3: memref<256x128xbf16, #tpu.memory_space<vmem>>, %arg4: memref<8x1xf32, #tpu.memory_space<vmem>>, %arg5: memref<8x1xi32, #tpu.memory_space<vmem>>, %arg6: memref<8x256xf32, #tpu.memory_space<vmem>>, %arg7: memref<1x8x1xf32, #tpu.memory_space<vmem>>, %arg8: memref<1x8x1xf32, #tpu.memory_space<vmem>>, %arg9: memref<8x1xf32, #tpu.memory_space<vmem>>, %arg10: memref<8x1xf32, #tpu.memory_space<vmem>>) attributes {dimension_semantics = [#tpu.dimension_semantics<parallel>, #tpu.dimension_semantics<arbitrary>], iteration_bounds = array<i64: 2, 2>, scalar_prefetch = 0 : i64, scratch_operands = 2 : i64, tpu.core_type = #tpu.core_type<tc>, window_params = [{pipeline_mode = #tpu.pipeline_mode<synchronous>, transform_indices = @transform_0, window_bounds = array<i64: 8, 128>}, {transform_indices = @transform_1, window_bounds = array<i64: 256, 128>}, {pipeline_mode = #tpu.pipeline_mode<synchronous>, transform_indices = @transform_2, window_bounds = array<i64: 8, 1>}, {pipeline_mode = #tpu.pipeline_mode<synchronous>, transform_indices = @transform_3, window_bounds = array<i64: 8, 1>}, {transform_indices = @transform_4, window_bounds = array<i64: 8, 256>}, {transform_indices = @transform_5, window_bounds = array<i64: 1, 8, 1>}, {transform_indices = @transform_6, window_bounds = array<i64: 1, 8, 1>}]} {
    %c2_i32 = arith.constant 2 : i32
    %0 = arith.muli %arg0, %c2_i32 : i32
    %1 = arith.addi %0, %arg1 : i32
    %c0_i32 = arith.constant 0 : i32
    %2 = arith.cmpi eq, %arg1, %c0_i32 : i32
    %3 = arith.extui %2 : i1 to i32
    %c0_i32_0 = arith.constant 0 : i32
    %4 = arith.cmpi ne, %3, %c0_i32_0 : i32
    scf.if %4 {
      %cst_31 = arith.constant 0.000000e+00 : f32
      %61 = vector.broadcast %cst_31 : f32 to vector<8x1xf32>
      %c0_32 = arith.constant 0 : index
      %c0_33 = arith.constant 0 : index
      %62 = vector.load %arg9[%c0_32, %c0_33] : memref<8x1xf32, #tpu.memory_space<vmem>>, vector<8x1xf32>
      tpu.vector_store %arg9[%c0_32, %c0_33], %61 {strides = array<i32>} : memref<8x1xf32, #tpu.memory_space<vmem>>, vector<8x1xf32>,
      %cst_34 = arith.constant 0.000000e+00 : f32
      %63 = vector.broadcast %cst_34 : f32 to vector<8x1xf32>
      %c0_35 = arith.constant 0 : index
      %c0_36 = arith.constant 0 : index
      %64 = vector.load %arg10[%c0_35, %c0_36] : memref<8x1xf32, #tpu.memory_space<vmem>>, vector<8x1xf32>
      tpu.vector_store %arg10[%c0_35, %c0_36], %63 {strides = array<i32>} : memref<8x1xf32, #tpu.memory_space<vmem>>, vector<8x1xf32>,
    } else {
    }
    %c0 = arith.constant 0 : index
    %c0_1 = arith.constant 0 : index
    %5 = vector.load %arg3[%c0, %c0_1] : memref<256x128xbf16, #tpu.memory_space<vmem>>, vector<256x128xbf16>
    %6 = arith.extf %5 : vector<256x128xbf16> to vector<256x128xf32>
    %7 = arith.mulf %6, %6 : vector<256x128xf32>
    %cst = arith.constant 1.000000e+00 : f32
    %8 = vector.broadcast %cst : f32 to vector<8x128xf32>
    %cst_2 = arith.constant dense<0.000000e+00> : vector<8x256xf32>
    %9 = tpu.matmul %8, %7, %cst_2 {dimension_numbers = #tpu.dot_dimension_numbers<[1], [1], [0], [0], [0, 0, 1, 0], [], []>} : vector<8x128xf32>, vector<256x128xf32>, vector<8x256xf32> -> vector<8x256xf32>
    %10 = vector.extract_strided_slice %9 {offsets = [0, 0], sizes = [1, 256], strides = [1, 1]} : vector<8x256xf32> to vector<1x256xf32>
    %cst_3 = arith.constant 1.000000e-10 : f32
    %11 = vector.broadcast %cst_3 : f32 to vector<1x256xf32>
    %12 = arith.cmpf ogt, %10, %11 : vector<1x256xf32>
    %13 = math.rsqrt %10 : vector<1x256xf32>
    %cst_4 = arith.constant 1.000000e+05 : f32
    %14 = vector.broadcast %cst_4 : f32 to vector<1x256xf32>
    %15 = arith.select %12, %13, %14 : vector<1x256xi1>, vector<1x256xf32>
    %c0_5 = arith.constant 0 : index
    %c0_6 = arith.constant 0 : index
    %16 = vector.load %arg2[%c0_5, %c0_6] : memref<8x128xbf16, #tpu.memory_space<vmem>>, vector<8x128xbf16>
    %c0_7 = arith.constant 0 : index
    %c0_8 = arith.constant 0 : index
    %17 = vector.load %arg3[%c0_7, %c0_8] : memref<256x128xbf16, #tpu.memory_space<vmem>>, vector<256x128xbf16>
    %cst_9 = arith.constant dense<0.000000e+00> : vector<8x256xf32>
    %18 = tpu.matmul %16, %17, %cst_9 {dimension_numbers = #tpu.dot_dimension_numbers<[1], [1], [0], [0], [0, 0, 1, 0], [], []>} : vector<8x128xbf16>, vector<256x128xbf16>, vector<8x256xf32> -> vector<8x256xf32>
    %19 = vector.broadcast %15 : vector<1x256xf32> to vector<8x256xf32>
    %20 = arith.mulf %18, %19 : vector<8x256xf32>
    %cst_10 = arith.constant -1.000000e+00 : f32
    %cst_11 = arith.constant 1.000000e+00 : f32
    %21 = vector.broadcast %cst_10 : f32 to vector<8x256xf32>
    %22 = arith.maximumf %21, %20 : vector<8x256xf32>
    %23 = vector.broadcast %cst_11 : f32 to vector<8x256xf32>
    %24 = arith.minimumf %23, %22 : vector<8x256xf32>
    %c0_12 = arith.constant 0 : index
    %c0_13 = arith.constant 0 : index
    %25 = vector.load %arg4[%c0_12, %c0_13] : memref<8x1xf32, #tpu.memory_space<vmem>>, vector<8x1xf32>
    %c0_14 = arith.constant 0 : index
    %c0_15 = arith.constant 0 : index
    %26 = vector.load %arg5[%c0_14, %c0_15] : memref<8x1xi32, #tpu.memory_space<vmem>>, vector<8x1xi32>
    %27 = tpu.iota {dimensions = array<i32: 1>} : vector<8x256xi32>
    %c256_i32 = arith.constant 256 : i32
    %28 = arith.muli %1, %c256_i32 : i32
    %29 = vector.broadcast %28 : i32 to vector<8x256xi32>
    %30 = arith.addi %27, %29 : vector<8x256xi32>
    %31 = vector.broadcast %25 : vector<8x1xf32> to vector<8x256xf32>
    %32 = arith.cmpf ogt, %24, %31 : vector<8x256xf32>
    %33 = vector.broadcast %26 : vector<8x1xi32> to vector<8x256xi32>
    %34 = arith.cmpi ne, %30, %33 : vector<8x256xi32>
    %35 = arith.andi %32, %34 : vector<8x256xi1>
    %c1024_i32 = arith.constant 1024 : i32
    %36 = vector.broadcast %c1024_i32 : i32 to vector<8x256xi32>
    %37 = arith.cmpi slt, %30, %36 : vector<8x256xi32>
    %38 = arith.andi %35, %37 : vector<8x256xi1>
    %c0_16 = arith.constant 0 : index
    %c0_17 = arith.constant 0 : index
    %39 = vector.load %arg9[%c0_16, %c0_17] : memref<8x1xf32, #tpu.memory_space<vmem>>, vector<8x1xf32>
    %40 = arith.extui %38 : vector<8x256xi1> to vector<8x256xi32>
    %41 = arith.sitofp %40 : vector<8x256xi32> to vector<8x256xf32>
    %cst_18 = arith.constant dense<0.000000e+00> : vector<8xf32>
    %42 = vector.multi_reduction <add>, %41, %cst_18 [1] : vector<8x256xf32> to vector<8xf32>
    %43 = vector.shape_cast %42 : vector<8xf32> to vector<8x1xf32>
    %44 = arith.addf %39, %43 : vector<8x1xf32>
    %c0_19 = arith.constant 0 : index
    %c0_20 = arith.constant 0 : index
    %45 = vector.load %arg9[%c0_19, %c0_20] : memref<8x1xf32, #tpu.memory_space<vmem>>, vector<8x1xf32>
    tpu.vector_store %arg9[%c0_19, %c0_20], %44 {strides = array<i32>} : memref<8x1xf32, #tpu.memory_space<vmem>>, vector<8x1xf32>,
    %c0_21 = arith.constant 0 : index
    %c0_22 = arith.constant 0 : index
    %46 = vector.load %arg10[%c0_21, %c0_22] : memref<8x1xf32, #tpu.memory_space<vmem>>, vector<8x1xf32>
    %47 = vector.broadcast %25 : vector<8x1xf32> to vector<8x256xf32>
    %48 = arith.subf %24, %47 : vector<8x256xf32>
    %cst_23 = arith.constant 0.000000e+00 : f32
    %49 = vector.broadcast %cst_23 : f32 to vector<8x256xf32>
    %50 = arith.select %38, %48, %49 : vector<8x256xi1>, vector<8x256xf32>
    %cst_24 = arith.constant dense<0.000000e+00> : vector<8xf32>
    %51 = vector.multi_reduction <add>, %50, %cst_24 [1] : vector<8x256xf32> to vector<8xf32>
    %52 = vector.shape_cast %51 : vector<8xf32> to vector<8x1xf32>
    %53 = arith.addf %46, %52 : vector<8x1xf32>
    %c0_25 = arith.constant 0 : index
    %c0_26 = arith.constant 0 : index
    %54 = vector.load %arg10[%c0_25, %c0_26] : memref<8x1xf32, #tpu.memory_space<vmem>>, vector<8x1xf32>
    tpu.vector_store %arg10[%c0_25, %c0_26], %53 {strides = array<i32>} : memref<8x1xf32, #tpu.memory_space<vmem>>, vector<8x1xf32>,
    %cst_27 = arith.constant 6.400000e+01 : f32
    %55 = vector.broadcast %cst_27 : f32 to vector<8x256xf32>
    %56 = arith.mulf %24, %55 : vector<8x256xf32>
    %c0_28 = arith.constant 0 : index
    %c0_29 = arith.constant 0 : index
    %57 = vector.load %arg6[%c0_28, %c0_29] : memref<8x256xf32, #tpu.memory_space<vmem>>, vector<8x256xf32>
    tpu.vector_store %arg6[%c0_28, %c0_29], %56 {strides = array<i32>} : memref<8x256xf32, #tpu.memory_space<vmem>>, vector<8x256xf32>,
    %c1_i32 = arith.constant 1 : i32
    %58 = arith.cmpi eq, %arg1, %c1_i32 : i32
    %59 = arith.extui %58 : i1 to i32
    %c0_i32_30 = arith.constant 0 : i32
    %60 = arith.cmpi ne, %59, %c0_i32_30 : i32
    scf.if %60 {
      %c0_31 = arith.constant 0 : index
      %c0_32 = arith.constant 0 : index
      %61 = vector.load %arg9[%c0_31, %c0_32] : memref<8x1xf32, #tpu.memory_space<vmem>>, vector<8x1xf32>
      %c0_33 = arith.constant 0 : index
      %c0_34 = arith.constant 0 : index
      %c0_35 = arith.constant 0 : index
      %62 = vector.load %arg7[%c0_33, %c0_34, %c0_35] : memref<1x8x1xf32, #tpu.memory_space<vmem>>, vector<1x8x1xf32>
      %63 = vector.shape_cast %62 : vector<1x8x1xf32> to vector<8x1xf32>
      %64 = vector.shape_cast %61 : vector<8x1xf32> to vector<1x8x1xf32>
      tpu.vector_store %arg7[%c0_33, %c0_34, %c0_35], %64 {strides = array<i32>} : memref<1x8x1xf32, #tpu.memory_space<vmem>>, vector<1x8x1xf32>,
      %c0_36 = arith.constant 0 : index
      %c0_37 = arith.constant 0 : index
      %65 = vector.load %arg10[%c0_36, %c0_37] : memref<8x1xf32, #tpu.memory_space<vmem>>, vector<8x1xf32>
      %c0_38 = arith.constant 0 : index
      %c0_39 = arith.constant 0 : index
      %c0_40 = arith.constant 0 : index
      %66 = vector.load %arg8[%c0_38, %c0_39, %c0_40] : memref<1x8x1xf32, #tpu.memory_space<vmem>>, vector<1x8x1xf32>
      %67 = vector.shape_cast %66 : vector<1x8x1xf32> to vector<8x1xf32>
      %68 = vector.shape_cast %65 : vector<8x1xf32> to vector<1x8x1xf32>
      tpu.vector_store %arg8[%c0_38, %c0_39, %c0_40], %68 {strides = array<i32>} : memref<1x8x1xf32, #tpu.memory_space<vmem>>, vector<1x8x1xf32>,
    } else {
    }
    return
  }
  func.func @transform_0(%arg0: i32, %arg1: i32) -> (i32, i32) {
    %c0_i32 = arith.constant 0 : i32
    %c0_i32_0 = arith.constant 0 : i32
    %c0_i32_1 = arith.constant 0 : i32
    return %c0_i32, %c0_i32_0 : i32, i32
  }
  func.func @transform_1(%arg0: i32, %arg1: i32) -> (i32, i32) {
    %c2_i32 = arith.constant 2 : i32
    %0 = arith.muli %arg0, %c2_i32 : i32
    %1 = arith.addi %0, %arg1 : i32
    %c0_i32 = arith.constant 0 : i32
    %c0_i32_0 = arith.constant 0 : i32
    return %1, %c0_i32 : i32, i32
  }
  func.func @transform_2(%arg0: i32, %arg1: i32) -> (i32, i32) {
    %c0_i32 = arith.constant 0 : i32
    %c0_i32_0 = arith.constant 0 : i32
    %c0_i32_1 = arith.constant 0 : i32
    return %c0_i32, %c0_i32_0 : i32, i32
  }
  func.func @transform_3(%arg0: i32, %arg1: i32) -> (i32, i32) {
    %c0_i32 = arith.constant 0 : i32
    %c0_i32_0 = arith.constant 0 : i32
    %c0_i32_1 = arith.constant 0 : i32
    return %c0_i32, %c0_i32_0 : i32, i32
  }
  func.func @transform_4(%arg0: i32, %arg1: i32) -> (i32, i32) {
    %c2_i32 = arith.constant 2 : i32
    %0 = arith.muli %arg0, %c2_i32 : i32
    %1 = arith.addi %0, %arg1 : i32
    %c0_i32 = arith.constant 0 : i32
    %c0_i32_0 = arith.constant 0 : i32
    return %c0_i32, %1 : i32, i32
  }
  func.func @transform_5(%arg0: i32, %arg1: i32) -> (i32, i32, i32) {
    %c0_i32 = arith.constant 0 : i32
    %c0_i32_0 = arith.constant 0 : i32
    %c0_i32_1 = arith.constant 0 : i32
    return %arg0, %c0_i32, %c0_i32_0 : i32, i32, i32
  }
  func.func @transform_6(%arg0: i32, %arg1: i32) -> (i32, i32, i32) {
    %c0_i32 = arith.constant 0 : i32
    %c0_i32_0 = arith.constant 0 : i32
    %c0_i32_1 = arith.constant 0 : i32
    return %arg0, %c0_i32, %c0_i32_0 : i32, i32, i32
  }
}

</mosaic_0001>

<llo_original>
// kernel: haaml_forward.1
$region0: #{haaml_forward.1}
  #allocation0 [shape = 'u32[]', space=smem, size = 0x4, offset = 0x4, fixed_abs, tag = 'smem constant byte address 0x4 - core index']
  #allocation1 [shape = 'u32[144,128]{1,0:T(1,128)}', space=vmem, size = 0x12000, scoped, tag = 'internal scratch']
  #allocation2 [shape = 'f32[8,1]{1,0:T(8,128)}', space=vmem, size = 0x1000, scoped, tag = 'scratch operand']
  #allocation3 [shape = 'f32[8,1]{1,0:T(8,128)}', space=vmem, size = 0x1000, scoped, tag = 'scratch operand']
  %s0 = inlined_call_operand.vmem [shape: bf16[8,128], index: 0, kind: input, shape index: {}]
  %s1 = inlined_call_operand.vmem [shape: bf16[1024,128], index: 1, kind: input, shape index: {}]
  %s2 = inlined_call_operand.vmem [shape: f32[8,1], index: 2, kind: input, shape index: {}]
  %s3 = inlined_call_operand.vmem [shape: s32[8,1], index: 3, kind: input, shape index: {}]
  %s4 = inlined_call_operand.vmem [shape: f32[8,1024], index: 4, kind: output, shape index: {0}]
  %s5 = inlined_call_operand.vmem [shape: f32[2,8,1], index: 5, kind: output, shape index: {1}]
  %s6 = inlined_call_operand.vmem [shape: f32[2,8,1], index: 6, kind: output, shape index: {2}]
  %7 = xla_tuple %s4, %s5, %s6
  %s8 = sld [smem:[#allocation0]]
  $region73: #{haaml_forward.1} parent=0
    _
  %s10 = ssub.s32 1, %s8
  %s11 = scalar_select 0, %s10, %s8
  loop: start=0, step=1, limit=6
  $region2: #{haaml_forward.1} parent=0 // loop_pre_header
    _
  $region3: #{haaml_forward.1} parent=0 // loop_header
    %s13 = sphi 0, %s17
    %p14 = scmp.ge.s32.totalorder %s13, 6
    %s20 = sphi 0, %s32
    %s21 = sphi 0, %s28
    %s22 = sphi 0, %s20
    %s23 = sphi 0, %s21
    %s24 = sphi 0, %s22
    %s25 = sphi 0, %s23
    %s33 = sphi 0, %s33
    %s35 = sphi 0, %s33
    %s36 = sphi 0, %s35
    %s50 = sphi 0, %s36
    %s60 = sphi 0, %s62
    %s63 = sphi 0, %s60
    %s64 = sphi 0, %s63
    %s80 = sphi 0, %s64
    %s84 = sphi 0, %s84
    %s86 = sphi 0, %s84
    %s87 = sphi 0, %s86
    %s101 = sphi 0, %s87
    %s105 = sphi 0, %s105
    %s107 = sphi 0, %s105
    %s108 = sphi 0, %s107
    %s122 = sphi 0, %s108
    %s132 = sphi 0, %s134
    %s135 = sphi 0, %s132
    %s136 = sphi 0, %s135
    %s152 = sphi 0, %s136
    %s158 = sphi 0, %s160
    %s161 = sphi 0, %s158
    %s162 = sphi 0, %s161
    %s178 = sphi 0, %s162
    %s184 = sphi 0, %s186
    %s187 = sphi 0, %s184
    %s188 = sphi 0, %s187
    %s204 = sphi 0, %s188
  $region4: #{haaml_forward.1} parent=0 // loop_header_branch
    %16 = sbr.rel (%p14) target = $region8
  $region5: #{haaml_forward.1} parent=0 // loop_body
    %s18 = ssub.s32 %s13, 1
    %s19 = ssub.s32 %s13, 2
    %s26 = sadd.s32 1, %s21
    %p27 = scmp.ge.s32.totalorder %s26, 2
    %s28 = scalar_select %p27, 0, %s26
    %s29 = sadd.s32 1, %s20
    %s30 = scalar_select %p27, %s29, %s20
    %p31 = scmp.ge.s32.totalorder %s30, 2
    %s32 = scalar_select %p31, 0, %s30
    %s34 = sadd.s32 %s33, 1
    %p37 = scmp.eq.s32.totalorder %s13, 3
    %p38 = scmp.ne.s32.totalorder %s33, %s35
    %p39 = scmp.eq.s32.totalorder %s13, 0
    %p40 = por %p38, %p39
    %p41 = scmp.ne.s32.totalorder %s33, %s35
    %p42 = scmp.eq.s32.totalorder %s18, 3
    %p43 = por %p41, %p42
    %p44 = scmp.ne.s32.totalorder %s35, %s36
    %p45 = scmp.eq.s32.totalorder %s18, 0
    %p46 = por %p44, %p45
    %p47 = scmp.ne.s32.totalorder %s35, %s36
    %p48 = scmp.eq.s32.totalorder %s19, 3
    %p49 = por %p47, %p48
    %p51 = scmp.ne.s32.totalorder %s36, %s50
    %p52 = scmp.eq.s32.totalorder %s19, 0
    %p53 = por %p51, %p52
    %s54 = smul.u32 %s20, 2
    %s55 = sadd.s32 %s54, %s21
    %s56 = smul.u32 %s32, 2
    %s57 = sadd.s32 %s56, %s28
    %s58 = ssub.s32 %s55, %s57
    %p59 = scmp.eq.s32.totalorder %s58, 0
    %s61 = sadd.s32 %s60, 1
    %s62 = scalar_select %p59, %s60, %s61
    %p65 = pneg %p59
    %p66 = scmp.eq.s32.totalorder %s13, 3
    %p67 = por %p65, %p66
    %p68 = scmp.ne.s32.totalorder %s60, %s63
    %p69 = scmp.eq.s32.totalorder %s13, 0
    %p70 = por %p68, %p69
    %p71 = scmp.ne.s32.totalorder %s60, %s63
    %p72 = scmp.eq.s32.totalorder %s18, 3
    %p73 = por %p71, %p72
    %p74 = scmp.ne.s32.totalorder %s63, %s64
    %p75 = scmp.eq.s32.totalorder %s18, 0
    %p76 = por %p74, %p75
    %p77 = scmp.ne.s32.totalorder %s63, %s64
    %p78 = scmp.eq.s32.totalorder %s19, 3
    %p79 = por %p77, %p78
    %p81 = scmp.ne.s32.totalorder %s64, %s80
    %p82 = scmp.eq.s32.totalorder %s19, 0
    %p83 = por %p81, %p82
    %s85 = sadd.s32 %s84, 1
    %p88 = scmp.eq.s32.totalorder %s13, 3
    %p89 = scmp.ne.s32.totalorder %s84, %s86
    %p90 = scmp.eq.s32.totalorder %s13, 0
    %p91 = por %p89, %p90
    %p92 = scmp.ne.s32.totalorder %s84, %s86
    %p93 = scmp.eq.s32.totalorder %s18, 3
    %p94 = por %p92, %p93
    %p95 = scmp.ne.s32.totalorder %s86, %s87
    %p96 = scmp.eq.s32.totalorder %s18, 0
    %p97 = por %p95, %p96
    %p98 = scmp.ne.s32.totalorder %s86, %s87
    %p99 = scmp.eq.s32.totalorder %s19, 3
    %p100 = por %p98, %p99
    %p102 = scmp.ne.s32.totalorder %s87, %s101
    %p103 = scmp.eq.s32.totalorder %s19, 0
    %p104 = por %p102, %p103
    %s106 = sadd.s32 %s105, 1
    %p109 = scmp.eq.s32.totalorder %s13, 3
    %p110 = scmp.ne.s32.totalorder %s105, %s107
    %p111 = scmp.eq.s32.totalorder %s13, 0
    %p112 = por %p110, %p111
    %p113 = scmp.ne.s32.totalorder %s105, %s107
    %p114 = scmp.eq.s32.totalorder %s18, 3
    %p115 = por %p113, %p114
    %p116 = scmp.ne.s32.totalorder %s107, %s108
    %p117 = scmp.eq.s32.totalorder %s18, 0
    %p118 = por %p116, %p117
    %p119 = scmp.ne.s32.totalorder %s107, %s108
    %p120 = scmp.eq.s32.totalorder %s19, 3
    %p121 = por %p119, %p120
    %p123 = scmp.ne.s32.totalorder %s108, %s122
    %p124 = scmp.eq.s32.totalorder %s19, 0
    %p125 = por %p123, %p124
    %s126 = smul.u32 %s20, 2
    %s127 = sadd.s32 %s126, %s21
    %s128 = smul.u32 %s32, 2
    %s129 = sadd.s32 %s128, %s28
    %s130 = ssub.s32 %s127, %s129
    %p131 = scmp.eq.s32.totalorder %s130, 0
    %s133 = sadd.s32 %s132, 1
    %s134 = scalar_select %p131, %s132, %s133
    %p137 = pneg %p131
    %p138 = scmp.eq.s32.totalorder %s13, 3
    %p139 = por %p137, %p138
    %p140 = scmp.ne.s32.totalorder %s132, %s135
    %p141 = scmp.eq.s32.totalorder %s13, 0
    %p142 = por %p140, %p141
    %p143 = scmp.ne.s32.totalorder %s132, %s135
    %p144 = scmp.eq.s32.totalorder %s18, 3
    %p145 = por %p143, %p144
    %p146 = scmp.ne.s32.totalorder %s135, %s136
    %p147 = scmp.eq.s32.totalorder %s18, 0
    %p148 = por %p146, %p147
    %p149 = scmp.ne.s32.totalorder %s135, %s136
    %p150 = scmp.eq.s32.totalorder %s19, 3
    %p151 = por %p149, %p150
    %p153 = scmp.ne.s32.totalorder %s136, %s152
    %p154 = scmp.eq.s32.totalorder %s19, 0
    %p155 = por %p153, %p154
    %s156 = ssub.s32 %s20, %s32
    %p157 = scmp.eq.s32.totalorder %s156, 0
    %s159 = sadd.s32 %s158, 1
    %s160 = scalar_select %p157, %s158, %s159
    %p163 = pneg %p157
    %p164 = scmp.eq.s32.totalorder %s13, 3
    %p165 = por %p163, %p164
    %p166 = scmp.ne.s32.totalorder %s158, %s161
    %p167 = scmp.eq.s32.totalorder %s13, 0
    %p168 = por %p166, %p167
    %p169 = scmp.ne.s32.totalorder %s158, %s161
    %p170 = scmp.eq.s32.totalorder %s18, 3
    %p171 = por %p169, %p170
    %p172 = scmp.ne.s32.totalorder %s161, %s162
    %p173 = scmp.eq.s32.totalorder %s18, 0
    %p174 = por %p172, %p173
    %p175 = scmp.ne.s32.totalorder %s161, %s162
    %p176 = scmp.eq.s32.totalorder %s19, 3
    %p177 = por %p175, %p176
    %p179 = scmp.ne.s32.totalorder %s162, %s178
    %p180 = scmp.eq.s32.totalorder %s19, 0
    %p181 = por %p179, %p180
    %s182 = ssub.s32 %s20, %s32
    %p183 = scmp.eq.s32.totalorder %s182, 0
    %s185 = sadd.s32 %s184, 1
    %s186 = scalar_select %p183, %s184, %s185
    %p189 = pneg %p183
    %p190 = scmp.eq.s32.totalorder %s13, 3
    %p191 = por %p189, %p190
    %p192 = scmp.ne.s32.totalorder %s184, %s187
    %p193 = scmp.eq.s32.totalorder %s13, 0
    %p194 = por %p192, %p193
    %p195 = scmp.ne.s32.totalorder %s184, %s187
    %p196 = scmp.eq.s32.totalorder %s18, 3
    %p197 = por %p195, %p196
    %p198 = scmp.ne.s32.totalorder %s187, %s188
    %p199 = scmp.eq.s32.totalorder %s18, 0
    %p200 = por %p198, %p199
    %p201 = scmp.ne.s32.totalorder %s187, %s188
    %p202 = scmp.eq.s32.totalorder %s19, 3
    %p203 = por %p201, %p202
    %p205 = scmp.ne.s32.totalorder %s188, %s204
    %p206 = scmp.eq.s32.totalorder %s19, 0
    %p207 = por %p205, %p206
    %p208 = scmp.le.s32.totalorder 1, %s13
    %p209 = scmp.lt.s32.totalorder %s13, 5
    %p210 = pnand %p208, %p209
    %p211 = pneg %p210
    // Predicated region
    $region9: #{haaml_forward.1} parent=5 // pred_check
      _
    $region10: #{haaml_forward.1} parent=5 // pred_check_branch
      %213 = sbr.rel (%p210) target = $region12
    $region11: #{haaml_forward.1} parent=5 // pred_region
      %s214 = ssub.s32 %s13, 1
      // Predicated region
      $region13: #{haaml_forward.1} parent=11 // pred_check
        %p215 = pneg %p46
      $region14: #{haaml_forward.1} parent=11 // pred_check_branch
        %217 = sbr.rel (%p215) target = $region16
      $region15: #{haaml_forward.1} parent=11 // pred_region
        _
      $region16: #{haaml_forward.1} parent=11 // pred_fallthru
        _
      // Predicated region
      $region17: #{haaml_forward.1} parent=11 // pred_check
        %p218 = pneg %p97
      $region18: #{haaml_forward.1} parent=11 // pred_check_branch
        %220 = sbr.rel (%p218) target = $region20
      $region19: #{haaml_forward.1} parent=11 // pred_region
        _
      $region20: #{haaml_forward.1} parent=11 // pred_fallthru
        _
      // Predicated region
      $region21: #{haaml_forward.1} parent=11 // pred_check
        %p221 = pneg %p118
      $region22: #{haaml_forward.1} parent=11 // pred_check_branch
        %223 = sbr.rel (%p221) target = $region24
      $region23: #{haaml_forward.1} parent=11 // pred_region
        _
      $region24: #{haaml_forward.1} parent=11 // pred_fallthru
        _
    $region12: #{haaml_forward.1} parent=5 // pred_fallthru
      _
    %p224 = scmp.lt.s32.totalorder %s13, 4
    // Predicated region
    $region25: #{haaml_forward.1} parent=5 // pred_check
      %p225 = pneg %p224
    $region26: #{haaml_forward.1} parent=5 // pred_check_branch
      %227 = sbr.rel (%p225) target = $region28
    $region27: #{haaml_forward.1} parent=5 // pred_region
      // Predicated region
      $region29: #{haaml_forward.1} parent=27 // pred_check
        %p228 = pneg %p70
      $region30: #{haaml_forward.1} parent=27 // pred_check_branch
        %230 = sbr.rel (%p228) target = $region32
      $region31: #{haaml_forward.1} parent=27 // pred_region
        %s231 = smul.u32 %s20, 2
        %s232 = sadd.s32 %s231, %s21
        %s233 = smul.u32 32, %s232
        %p234 = scmp.lt.s32.totalorder %s233, 127
        %s235 = scalar_select %p234, %s233, 127
        %s236 = smul.addr %s235, 4
        %s237 = scalar_lea.vmem %s1, %s236
        %s238 = smul.u32 %s20, 2
        %s239 = sadd.s32 %s238, %s21
        %s240 = smul.u32 32, %s239
      $region32: #{haaml_forward.1} parent=27 // pred_fallthru
        _
    $region28: #{haaml_forward.1} parent=5 // pred_fallthru
      _
    %p241 = scmp.le.s32.totalorder 1, %s13
    %p242 = scmp.lt.s32.totalorder %s13, 5
    %p243 = pnand %p241, %p242
    %p244 = pneg %p243
    // Predicated region
    $region33: #{haaml_forward.1} parent=5 // pred_check
      _
    $region34: #{haaml_forward.1} parent=5 // pred_check_branch
      %246 = sbr.rel (%p243) target = $region36
    $region35: #{haaml_forward.1} parent=5 // pred_region
      %s247 = ssub.s32 %s13, 1
      %p248 = pneg %p46
      %p249 = pneg %p43
      %s250 = smul.u32 %s22, 2
      %s251 = sadd.s32 %s250, %s23
      %s252 = smul.u32 32, %s251
      %p253 = scmp.lt.s32.totalorder %s252, 127
      %s254 = scalar_select %p253, %s252, 127
      %s255 = smul.addr %s254, 4
      %s256 = scalar_lea.vmem %s1, %s255
      %p257 = pneg %p76
      %p258 = pneg %p73
      %p259 = pneg %p97
      %p260 = pneg %p94
      %p261 = pneg %p118
      %p262 = pneg %p115
      %p263 = pneg %p148
      %p264 = pneg %p145
      %s265 = smul.u32 %s22, 2
      %s266 = sadd.s32 %s265, %s23
      %s267 = smul.u32 2, %s266
      %p268 = scmp.lt.s32.totalorder %s267, 7
      %s269 = scalar_select %p268, %s267, 7
      %s270 = smul.addr %s269, 8
      %s271 = scalar_lea.vmem %s4, %s270
      %p272 = pneg %p174
      %p273 = pneg %p171
      %p274 = scmp.lt.s32.totalorder %s22, 1
      %s275 = scalar_select %p274, %s22, 1
      %s276 = smul.addr %s275, 8
      %s277 = scalar_lea.vmem %s5, %s276
      %p278 = pneg %p200
      %p279 = pneg %p197
      %p280 = scmp.lt.s32.totalorder %s22, 1
      %s281 = scalar_select %p280, %s22, 1
      %s282 = smul.addr %s281, 8
      %s283 = scalar_lea.vmem %s6, %s282
      %s284 = smul.u32 %s22, 2
      %s285 = sadd.s32 %s284, %s23
      %s286 = smul.u32 32, %s285
      %p287 = scmp.lt.s32.totalorder %s286, 127
      %s288 = scalar_select %p287, %s286, 127
      %s289 = smul.addr %s288, 4
      %s290 = scalar_lea.vmem %s1, %s289
      %s291 = smul.u32 %s22, 2
      %s292 = sadd.s32 %s291, %s23
      %s293 = smul.u32 32, %s292
      %s294 = smul.u32 %s22, 2
      %s295 = sadd.s32 %s294, %s23
      %s296 = smul.u32 2, %s295
      %p297 = scmp.lt.s32.totalorder %s296, 7
      %s298 = scalar_select %p297, %s296, 7
      %s299 = smul.addr %s298, 8
      %s300 = scalar_lea.vmem %s4, %s299
      %s301 = smul.u32 %s22, 2
      %s302 = sadd.s32 %s301, %s23
      %s303 = smul.u32 2, %s302
      %p304 = scmp.lt.s32.totalorder %s22, 1
      %s305 = scalar_select %p304, %s22, 1
      %s306 = smul.addr %s305, 8
      %s307 = scalar_lea.vmem %s5, %s306
      %p308 = scmp.lt.s32.totalorder %s22, 1
      %s309 = scalar_select %p308, %s22, 1
      %s310 = smul.addr %s309, 8
      %s311 = scalar_lea.vmem %s6, %s310
      %s313 = smul.u32 %s22, 2
      %s314 = sadd.s32 %s313, %s23
      %p315 = scmp.eq.s32.totalorder %s23, 0
      // Predicated region
      $region37: #{haaml_forward.1} parent=35 // pred_check
        %p316 = pneg %p315
      $region38: #{haaml_forward.1} parent=35 // pred_check_branch
        %318 = sbr.rel (%p316) target = $region40
      $region39: #{haaml_forward.1} parent=35 // pred_region
        %vm319 = vcmask 7168
        %320 = vst.msk [vmem:[#allocation2] sm:$0xff] %vm319, 0.0
        %321 = vst.msk [vmem:[#allocation3] sm:$0xff] %vm319, 0.0
      $region40: #{haaml_forward.1} parent=35 // pred_fallthru
        _
      %v322 = vld [vmem:[%s290] sm:$0xf]
      %v323 = vld [vmem:[%s290 + $0x4] sm:$0xf]
      %v324 = vld [vmem:[%s290 + $0x8] sm:$0xf]
      %v325 = vld [vmem:[%s290 + $0xc] sm:$0xf]
      %v326 = vld [vmem:[%s290 + $0x10] sm:$0xf]
      %v327 = vld [vmem:[%s290 + $0x14] sm:$0xf]
      %v328 = vld [vmem:[%s290 + $0x18] sm:$0xf]
      %v329 = vld [vmem:[%s290 + $0x1c] sm:$0xf]
      %v330 = vld [vmem:[%s290 + $0x20] sm:$0xf]
      %v331 = vld [vmem:[%s290 + $0x24] sm:$0xf]
      %v332 = vld [vmem:[%s290 + $0x28] sm:$0xf]
      %v333 = vld [vmem:[%s290 + $0x2c] sm:$0xf]
      %v334 = vld [vmem:[%s290 + $0x30] sm:$0xf]
      %v335 = vld [vmem:[%s290 + $0x34] sm:$0xf]
      %v336 = vld [vmem:[%s290 + $0x38] sm:$0xf]
      %v337 = vld [vmem:[%s290 + $0x3c] sm:$0xf]
      %v338 = vld [vmem:[%s290 + $0x40] sm:$0xf]
      %v339 = vld [vmem:[%s290 + $0x44] sm:$0xf]
      %v340 = vld [vmem:[%s290 + $0x48] sm:$0xf]
      %v341 = vld [vmem:[%s290 + $0x4c] sm:$0xf]
      %v342 = vld [vmem:[%s290 + $0x50] sm:$0xf]
      %v343 = vld [vmem:[%s290 + $0x54] sm:$0xf]
      %v344 = vld [vmem:[%s290 + $0x58] sm:$0xf]
      %v345 = vld [vmem:[%s290 + $0x5c] sm:$0xf]
      %v346 = vld [vmem:[%s290 + $0x60] sm:$0xf]
      %v347 = vld [vmem:[%s290 + $0x64] sm:$0xf]
      %v348 = vld [vmem:[%s290 + $0x68] sm:$0xf]
      %v349 = vld [vmem:[%s290 + $0x6c] sm:$0xf]
      %v350 = vld [vmem:[%s290 + $0x70] sm:$0xf]
      %v351 = vld [vmem:[%s290 + $0x74] sm:$0xf]
      %v352 = vld [vmem:[%s290 + $0x78] sm:$0xf]
      %v353 = vld [vmem:[%s290 + $0x7c] sm:$0xf]
      %v354 = vunpack.c.l.bf16 %v322
      %v355 = vunpack.c.l.bf16 %v323
      %v356 = vunpack.c.l.bf16 %v324
      %v357 = vunpack.c.l.bf16 %v325
      %v358 = vunpack.c.l.bf16 %v326
      %v359 = vunpack.c.l.bf16 %v327
      %v360 = vunpack.c.l.bf16 %v328
      %v361 = vunpack.c.l.bf16 %v329
      %v362 = vunpack.c.l.bf16 %v330
      %v363 = vunpack.c.l.bf16 %v331
      %v364 = vunpack.c.l.bf16 %v332
      %v365 = vunpack.c.l.bf16 %v333
      %v366 = vunpack.c.l.bf16 %v334
      %v367 = vunpack.c.l.bf16 %v335
      %v368 = vunpack.c.l.bf16 %v336
      %v369 = vunpack.c.l.bf16 %v337
      %v370 = vunpack.c.l.bf16 %v338
      %v371 = vunpack.c.l.bf16 %v339
      %v372 = vunpack.c.l.bf16 %v340
      %v373 = vunpack.c.l.bf16 %v341
      %v374 = vunpack.c.l.bf16 %v342
      %v375 = vunpack.c.l.bf16 %v343
      %v376 = vunpack.c.l.bf16 %v344
      %v377 = vunpack.c.l.bf16 %v345
      %v378 = vunpack.c.l.bf16 %v346
      %v379 = vunpack.c.l.bf16 %v347
      %v380 = vunpack.c.l.bf16 %v348
      %v381 = vunpack.c.l.bf16 %v349
      %v382 = vunpack.c.l.bf16 %v350
      %v383 = vunpack.c.l.bf16 %v351
      %v384 = vunpack.c.l.bf16 %v352
      %v385 = vunpack.c.l.bf16 %v353
      %v386 = vmul.f32 %v354, %v354
      %v387 = vmul.f32 %v355, %v355
      %v388 = vmul.f32 %v356, %v356
      %v389 = vmul.f32 %v357, %v357
      %v390 = vmul.f32 %v358, %v358
      %v391 = vmul.f32 %v359, %v359
      %v392 = vmul.f32 %v360, %v360
      %v393 = vmul.f32 %v361, %v361
      %v394 = vmul.f32 %v362, %v362
      %v395 = vmul.f32 %v363, %v363
      %v396 = vmul.f32 %v364, %v364
      %v397 = vmul.f32 %v365, %v365
      %v398 = vmul.f32 %v366, %v366
      %v399 = vmul.f32 %v367, %v367
      %v400 = vmul.f32 %v368, %v368
      %v401 = vmul.f32 %v369, %v369
      %v402 = vmul.f32 %v370, %v370
      %v403 = vmul.f32 %v371, %v371
      %v404 = vmul.f32 %v372, %v372
      %v405 = vmul.f32 %v373, %v373
      %v406 = vmul.f32 %v374, %v374
      %v407 = vmul.f32 %v375, %v375
      %v408 = vmul.f32 %v376, %v376
      %v409 = vmul.f32 %v377, %v377
      %v410 = vmul.f32 %v378, %v378
      %v411 = vmul.f32 %v379, %v379
      %v412 = vmul.f32 %v380, %v380
      %v413 = vmul.f32 %v381, %v381
      %v414 = vmul.f32 %v382, %v382
      %v415 = vmul.f32 %v383, %v383
      %v416 = vmul.f32 %v384, %v384
      %v417 = vmul.f32 %v385, %v385
      %418 = vmatprep.subr.mxu0 0.0
      %419 = vmatpush1.xpose.msra.mxu0 %v386
      %420 = vmatprep.subr.mxu0 0.0
      %421 = vmatpush1.xpose.msra.mxu0 %v387
      %422 = vmatprep.subr.mxu0 0.0
      %423 = vmatpush1.xpose.msra.mxu0 %v388
      %424 = vmatprep.subr.mxu0 0.0
      %425 = vmatpush1.xpose.msra.mxu0 %v389
      %426 = vmatprep.subr.mxu0 0.0
      %427 = vmatpush1.xpose.msra.mxu0 %v390
      %428 = vmatprep.subr.mxu0 0.0
      %429 = vmatpush1.xpose.msra.mxu0 %v391
      %430 = vmatprep.subr.mxu0 0.0
      %431 = vmatpush1.xpose.msra.mxu0 %v392
      %432 = vmatprep.subr.mxu0 0.0
      %433 = vmatpush1.xpose.msra.mxu0 %v393
      %434 = vmatprep.subr.mxu0 0.0
      %435 = vmatpush1.xpose.msra.mxu0 %v394
      %436 = vmatprep.subr.mxu0 0.0
      %437 = vmatpush1.xpose.msra.mxu0 %v395
      %438 = vmatprep.subr.mxu0 0.0
      %439 = vmatpush1.xpose.msra.mxu0 %v396
      %440 = vmatprep.subr.mxu0 0.0
      %441 = vmatpush1.xpose.msra.mxu0 %v397
      %442 = vmatprep.subr.mxu0 0.0
      %443 = vmatpush1.xpose.msra.mxu0 %v398
      %444 = vmatprep.subr.mxu0 0.0
      %445 = vmatpush1.xpose.msra.mxu0 %v399
      %446 = vmatprep.subr.mxu0 0.0
      %447 = vmatpush1.xpose.msra.mxu0 %v400
      %448 = vmatprep.subr.mxu0 0.0
      %449 = vmatpush1.xpose.msra.mxu0 %v401
      %450 = vmatprep.subr.mxu0 0.0
      %451 = vmatpush1.xpose.msra.mxu0 %v402
      %452 = vmatprep.subr.mxu0 0.0
      %453 = vmatpush1.xpose.msra.mxu0 %v403
      %454 = vmatprep.subr.mxu0 0.0
      %455 = vmatpush1.xpose.msra.mxu0 %v404
      %456 = vmatprep.subr.mxu0 0.0
      %457 = vmatpush1.xpose.msra.mxu0 %v405
      %458 = vmatprep.subr.mxu0 0.0
      %459 = vmatpush1.xpose.msra.mxu0 %v406
      %460 = vmatprep.subr.mxu0 0.0
      %461 = vmatpush1.xpose.msra.mxu0 %v407
      %462 = vmatprep.subr.mxu0 0.0
      %463 = vmatpush1.xpose.msra.mxu0 %v408
      %464 = vmatprep.subr.mxu0 0.0
      %465 = vmatpush1.xpose.msra.mxu0 %v409
      %466 = vmatprep.subr.mxu0 0.0
      %467 = vmatpush1.xpose.msra.mxu0 %v410
      %468 = vmatprep.subr.mxu0 0.0
      %469 = vmatpush1.xpose.msra.mxu0 %v411
      %470 = vmatprep.subr.mxu0 0.0
      %471 = vmatpush1.xpose.msra.mxu0 %v412
      %472 = vmatprep.subr.mxu0 0.0
      %473 = vmatpush1.xpose.msra.mxu0 %v413
      %474 = vmatprep.subr.mxu0 0.0
      %475 = vmatpush1.xpose.msra.mxu0 %v414
      %476 = vmatprep.subr.mxu0 0.0
      %477 = vmatpush1.xpose.msra.mxu0 %v415
      %478 = vmatprep.subr.mxu0 0.0
      %479 = vmatpush1.xpose.msra.mxu0 %v416
      %480 = vmatprep.subr.mxu0 0.0
      %481 = vmatpush1.xpose.msra.mxu0 %v417
      %482 = vmatprep.mubr.f32.mxu0 0.0
      %483 = vmatmul.mubr.f32.gmra.mrb[0].mxu0 1.0
      %v484 = vpop.f32.mrb[0].mxu0
      %v485 = vadd.f32 0.0, %v484
      %v486 = vpop.f32.mrb[0].mxu0
      %v487 = vadd.f32 0.0, %v486
      %488 = vdwg.mxu0
      %vm489 = vcmp.gt.f32.partialorder %v485, 1e-10
      %vm490 = vcmp.gt.f32.partialorder %v487, 1e-10
      %v491 = vrsqrt.pop %v485
      %v492 = vrsqrt.pop %v487
      %v493 = vsel %vm489, %v491, 100000.0
      %v494 = vsel %vm490, %v492, 100000.0
      %v495 = vld [vmem:[%s0] sm:$0xf]
      %v528 = vunpack.c.l.b16 %v322
      %v529 = vunpack.c.l.b16 %v323
      %v530 = vunpack.c.l.b16 %v324
      %v531 = vunpack.c.l.b16 %v325
      %v532 = vunpack.c.l.b16 %v326
      %v533 = vunpack.c.l.b16 %v327
      %v534 = vunpack.c.l.b16 %v328
      %v535 = vunpack.c.l.b16 %v329
      %v536 = vunpack.c.l.b16 %v330
      %v537 = vunpack.c.l.b16 %v331
      %v538 = vunpack.c.l.b16 %v332
      %v539 = vunpack.c.l.b16 %v333
      %v540 = vunpack.c.l.b16 %v334
      %v541 = vunpack.c.l.b16 %v335
      %v542 = vunpack.c.l.b16 %v336
      %v543 = vunpack.c.l.b16 %v337
      %v544 = vunpack.c.l.b16 %v338
      %v545 = vunpack.c.l.b16 %v339
      %v546 = vunpack.c.l.b16 %v340
      %v547 = vunpack.c.l.b16 %v341
      %v548 = vunpack.c.l.b16 %v342
      %v549 = vunpack.c.l.b16 %v343
      %v550 = vunpack.c.l.b16 %v344
      %v551 = vunpack.c.l.b16 %v345
      %v552 = vunpack.c.l.b16 %v346
      %v553 = vunpack.c.l.b16 %v347
      %v554 = vunpack.c.l.b16 %v348
      %v555 = vunpack.c.l.b16 %v349
      %v556 = vunpack.c.l.b16 %v350
      %v557 = vunpack.c.l.b16 %v351
      %v558 = vunpack.c.l.b16 %v352
      %v559 = vunpack.c.l.b16 %v353
      %v560 = vpack.c.b16 %v529, %v528
      %v561 = vpack.c.b16 %v531, %v530
      %v562 = vpack.c.b16 %v533, %v532
      %v563 = vpack.c.b16 %v535, %v534
      %v564 = vpack.c.b16 %v537, %v536
      %v565 = vpack.c.b16 %v539, %v538
      %v566 = vpack.c.b16 %v541, %v540
      %v567 = vpack.c.b16 %v543, %v542
      %v568 = vpack.c.b16 %v545, %v544
      %v569 = vpack.c.b16 %v547, %v546
      %v570 = vpack.c.b16 %v549, %v548
      %v571 = vpack.c.b16 %v551, %v550
      %v572 = vpack.c.b16 %v553, %v552
      %v573 = vpack.c.b16 %v555, %v554
      %v574 = vpack.c.b16 %v557, %v556
      %v575 = vpack.c.b16 %v559, %v558
      %592 = vmatprep.subr.bf16.mxu0 0
      %593 = vmatpush1.bf16.xpose.msra.mxu0 %v560
      %594 = vmatprep.subr.bf16.mxu0 0
      %595 = vmatpush1.bf16.xpose.msra.mxu0 %v561
      %596 = vmatprep.subr.bf16.mxu0 0
      %597 = vmatpush1.bf16.xpose.msra.mxu0 %v562
      %598 = vmatprep.subr.bf16.mxu0 0
      %599 = vmatpush1.bf16.xpose.msra.mxu0 %v563
      %600 = vmatprep.subr.bf16.mxu0 0
      %601 = vmatpush1.bf16.xpose.msra.mxu0 %v564
      %602 = vmatprep.subr.bf16.mxu0 0
      %603 = vmatpush1.bf16.xpose.msra.mxu0 %v565
      %604 = vmatprep.subr.bf16.mxu0 0
      %605 = vmatpush1.bf16.xpose.msra.mxu0 %v566
      %606 = vmatprep.subr.bf16.mxu0 0
      %607 = vmatpush1.bf16.xpose.msra.mxu0 %v567
      %608 = vmatprep.subr.bf16.mxu0 0
      %609 = vmatpush1.bf16.xpose.msra.mxu0 %v568
      %610 = vmatprep.subr.bf16.mxu0 0
      %611 = vmatpush1.bf16.xpose.msra.mxu0 %v569
      %612 = vmatprep.subr.bf16.mxu0 0
      %613 = vmatpush1.bf16.xpose.msra.mxu0 %v570
      %614 = vmatprep.subr.bf16.mxu0 0
      %615 = vmatpush1.bf16.xpose.msra.mxu0 %v571
      %616 = vmatprep.subr.bf16.mxu0 0
      %617 = vmatpush1.bf16.xpose.msra.mxu0 %v572
      %618 = vmatprep.subr.bf16.mxu0 0
      %619 = vmatpush1.bf16.xpose.msra.mxu0 %v573
      %620 = vmatprep.subr.bf16.mxu0 0
      %621 = vmatpush1.bf16.xpose.msra.mxu0 %v574
      %622 = vmatprep.subr.bf16.mxu0 0
      %623 = vmatpush1.bf16.xpose.msra.mxu0 %v575
      %624 = vmatprep.mubr.bf16.mxu0 0
      %625 = vmatmul.mubr.bf16.gmra.mrb[0].mxu0 %v495
      %v626 = vpop.f32.mrb[0].mxu0
      %v627 = vadd.f32 0.0, %v626
      %v628 = vpop.f32.mrb[0].mxu0
      %v629 = vadd.f32 0.0, %v628
      %v630 = vpop.f32.mrb[0].mxu0
      %v631 = vpop.f32.mrb[0].mxu0
      %632 = vdwg.mxu0
      %v633 = vlaneseq
      %v634 = vshrl.u32 %v633, 7
      %v635 = vsub.s32 0, %v634
      %v636 = vrot.slane %v493, %v635
      %v637 = vlaneseq
      %v638 = vshrl.u32 %v637, 7
      %v639 = vsub.s32 0, %v638
      %v640 = vrot.slane %v494, %v639
      %v641 = vmul.f32 %v627, %v636
      %v642 = vmul.f32 %v629, %v640
      %v643 = vmax.f32 %v641, -1.0
      %v644 = vmax.f32 %v642, -1.0
      %v645 = vmin.f32 %v643, 1.0
      %v646 = vmin.f32 %v644, 1.0
      %v647 = vld [vmem:[%s2] sm:$0xff]
      %v648 = vld [vmem:[%s3] sm:$0xff]
      %v649 = vlaneseq
      %v650 = vand.u32 %v649, 127
      %v651 = vadd.s32 %v650, 128
      %s652 = smul.u32 %s314, 256
      %v653 = vstv %s652
      %v654 = vadd.s32 %v650, %v653
      %v655 = vadd.s32 %v651, %v653
      %657 = vset.pattern.permute.xlu0 0
      %658 = vperm.xlu0 %657, %v647
      %v659 = vpop.permute.xlu0 %658
      %vm661 = vcmp.gt.f32.partialorder %v645, %v659
      %vm662 = vcmp.gt.f32.partialorder %v646, %v659
      %663 = vset.pattern.permute.xlu0 0
      %664 = vperm.xlu0 %663, %v648
      %v665 = vpop.permute.xlu0 %664
      %vm666 = vcmp.ne.s32.totalorder %v654, %v665
      %vm667 = vcmp.ne.s32.totalorder %v655, %v665
      %vm668 = vmand %vm661, %vm666
      %vm669 = vmand %vm662, %vm667
      %vm670 = vcmp.lt.s32.totalorder %v654, 1024
      %vm671 = vcmp.lt.s32.totalorder %v655, 1024
      %vm672 = vmand %vm668, %vm670
      %vm673 = vmand %vm669, %vm671
      %v674 = vld [vmem:[#allocation2] sm:$0xff]
      %v675 = vsel %vm672, 1, 0
      %v676 = vsel %vm673, 1, 0
      %v677 = vcvt.s32.f32 %v675
      %v678 = vcvt.s32.f32 %v676
      %v679 = vadd.f32 %v677, %v678
      %680 = vadd.xlane.f32.xlu0 %v679
      %v681 = vpop.xlane.xlu0 %680
      %v682 = vadd.f32 %v674, %v681
      %vm683 = vcmask 7168
      %684 = vst.msk [vmem:[#allocation2] sm:$0xff] %vm683, %v682
      %v685 = vld [vmem:[#allocation3] sm:$0xff]
      %v686 = vsub.f32 %v645, %v659
      %v687 = vsub.f32 %v646, %v659
      %v688 = vsel %vm672, %v686, 0.0
      %v689 = vsel %vm673, %v687, 0.0
      %v690 = vadd.f32 %v688, %v689
      %691 = vadd.xlane.f32.xlu0 %v690
      %v692 = vpop.xlane.xlu0 %691
      %v693 = vadd.f32 %v685, %v692
      %694 = vst.msk [vmem:[#allocation3] sm:$0xff] %vm683, %v693
      %v695 = vmul.f32 %v645, 64.0
      %v696 = vmul.f32 %v646, 64.0
      %697 = vst [vmem:[%s300] sm:$0xff] %v695
      %698 = vst [vmem:[%s300 + $0x8] sm:$0xff] %v696
      %p699 = scmp.eq.s32.totalorder %s23, 1
      // Predicated region
      $region41: #{haaml_forward.1} parent=35 // pred_check
        %p700 = pneg %p699
      $region42: #{haaml_forward.1} parent=35 // pred_check_branch
        %702 = sbr.rel (%p700) target = $region44
      $region43: #{haaml_forward.1} parent=35 // pred_region
        %v703 = vld [vmem:[#allocation2] sm:$0xff]
        %704 = vst.msk [vmem:[%s307] sm:$0xff] %vm683, %v703
        %v705 = vld [vmem:[#allocation3] sm:$0xff]
        %706 = vst.msk [vmem:[%s311] sm:$0xff] %vm683, %v705
      $region44: #{haaml_forward.1} parent=35 // pred_fallthru
        _
      %s707 = smul.u32 %s22, 2
      %s708 = sadd.s32 %s707, %s23
      %s709 = smul.u32 2, %s708
      %p710 = scmp.lt.s32.totalorder %s709, 7
      %s711 = scalar_select %p710, %s709, 7
      %s712 = smul.addr %s711, 8
      %s713 = scalar_lea.vmem %s4, %s712
      %p714 = scmp.lt.s32.totalorder %s22, 1
      %s715 = scalar_select %p714, %s22, 1
      %s716 = smul.addr %s715, 8
      %s717 = scalar_lea.vmem %s5, %s716
      %p718 = scmp.lt.s32.totalorder %s22, 1
      %s719 = scalar_select %p718, %s22, 1
      %s720 = smul.addr %s719, 8
      %s721 = scalar_lea.vmem %s6, %s720
      // Predicated region
      $region45: #{haaml_forward.1} parent=35 // pred_check
        %p722 = pneg %p145
      $region46: #{haaml_forward.1} parent=35 // pred_check_branch
        %724 = sbr.rel (%p722) target = $region48
      $region47: #{haaml_forward.1} parent=35 // pred_region
        %s725 = smul.u32 %s22, 2
        %s726 = sadd.s32 %s725, %s23
        %s727 = smul.u32 2, %s726
      $region48: #{haaml_forward.1} parent=35 // pred_fallthru
        _
      // Predicated region
      $region49: #{haaml_forward.1} parent=35 // pred_check
        %p728 = pneg %p171
      $region50: #{haaml_forward.1} parent=35 // pred_check_branch
        %730 = sbr.rel (%p728) target = $region52
      $region51: #{haaml_forward.1} parent=35 // pred_region
        _
      $region52: #{haaml_forward.1} parent=35 // pred_fallthru
        _
      // Predicated region
      $region53: #{haaml_forward.1} parent=35 // pred_check
        %p731 = pneg %p197
      $region54: #{haaml_forward.1} parent=35 // pred_check_branch
        %733 = sbr.rel (%p731) target = $region56
      $region55: #{haaml_forward.1} parent=35 // pred_region
        _
      $region56: #{haaml_forward.1} parent=35 // pred_fallthru
        _
    $region36: #{haaml_forward.1} parent=5 // pred_fallthru
      _
    %p734 = scmp.le.s32.totalorder 2, %s13
    // Predicated region
    $region57: #{haaml_forward.1} parent=5 // pred_check
      %p735 = pneg %p734
    $region58: #{haaml_forward.1} parent=5 // pred_check_branch
      %737 = sbr.rel (%p735) target = $region60
    $region59: #{haaml_forward.1} parent=5 // pred_region
      %s738 = ssub.s32 %s13, 2
      // Predicated region
      $region61: #{haaml_forward.1} parent=59 // pred_check
        %p739 = pneg %p151
      $region62: #{haaml_forward.1} parent=59 // pred_check_branch
        %741 = sbr.rel (%p739) target = $region64
      $region63: #{haaml_forward.1} parent=59 // pred_region
        %s742 = smul.u32 %s24, 2
        %s743 = sadd.s32 %s742, %s25
        %s744 = smul.u32 2, %s743
        %p745 = scmp.lt.s32.totalorder %s744, 7
        %s746 = scalar_select %p745, %s744, 7
        %s747 = smul.addr %s746, 8
        %s748 = scalar_lea.vmem %s4, %s747
      $region64: #{haaml_forward.1} parent=59 // pred_fallthru
        _
      // Predicated region
      $region65: #{haaml_forward.1} parent=59 // pred_check
        %p749 = pneg %p177
      $region66: #{haaml_forward.1} parent=59 // pred_check_branch
        %751 = sbr.rel (%p749) target = $region68
      $region67: #{haaml_forward.1} parent=59 // pred_region
        %p752 = scmp.lt.s32.totalorder %s24, 1
        %s753 = scalar_select %p752, %s24, 1
        %s754 = smul.addr %s753, 8
        %s755 = scalar_lea.vmem %s5, %s754
      $region68: #{haaml_forward.1} parent=59 // pred_fallthru
        _
      // Predicated region
      $region69: #{haaml_forward.1} parent=59 // pred_check
        %p756 = pneg %p203
      $region70: #{haaml_forward.1} parent=59 // pred_check_branch
        %758 = sbr.rel (%p756) target = $region72
      $region71: #{haaml_forward.1} parent=59 // pred_region
        %p759 = scmp.lt.s32.totalorder %s24, 1
        %s760 = scalar_select %p759, %s24, 1
        %s761 = smul.addr %s760, 8
        %s762 = scalar_lea.vmem %s6, %s761
      $region72: #{haaml_forward.1} parent=59 // pred_fallthru
        _
    $region60: #{haaml_forward.1} parent=5 // pred_fallthru
      _
  $region6: #{haaml_forward.1} parent=0 // loop_footer
    %s17 = sadd.s32 1, %s13
  $region7: #{haaml_forward.1} parent=0 // loop_footer_branch
    %12 = sbr.rel target = $region3
  $region8: #{haaml_forward.1} parent=0 // loop_exit
    _

</llo_original>
